<compile_context>
chip_gen: v5e
topology: v5e:2x2
jax: 0.10.0
libtpu: 0.0.40
codegen_flags: <defaults>
</compile_context>

<pallas_src>
import functools

import jax
import jax.numpy as jnp
from jax.experimental import pallas as pl
from jax.experimental.pallas import tpu as pltpu


def _round_up(x: int, m: int) -> int:
    return ((x + m - 1) // m) * m


def _batch_tile(batch: int) -> int:
    """Batch tile: whole batch when small, else a VMEM-friendly multiple of 8."""
    if batch <= 512:
        return batch
    for t in (512, 256, 128, 64, 32, 16, 8):
        if batch % t == 0:
            return t
    return batch


# ----------------------------------------------------------------------------
# Fused forward kernel
# ----------------------------------------------------------------------------
def _rotate_only_fused_kernel(x_ref, wb_ref, bb_ref, rot_ref, hw_ref, hb_ref,
                              o_ref, *, num_tasks, head_out, width_pad):
    # Backbone linear: rep = x @ Wb.T + bb                      -> (tm, L)
    rep = jax.lax.dot_general(
        x_ref[...], wb_ref[...],
        dimension_numbers=(((1,), (1,)), ((), ())),
        preferred_element_type=jnp.float32,
    ) + bb_ref[...]

    # Fold each task's rotation into its head weight (exact):
    #   W_eff_t = Wh_t @ R_t   =>   head_t(rotate(rep)) == rep @ W_eff_t.T + bh_t
    latent = rot_ref.shape[-1]
    parts = []
    for t in range(num_tasks):          # static unroll; num_tasks is a small constant
        parts.append(jax.lax.dot_general(
            hw_ref[t], rot_ref[t],
            dimension_numbers=(((1,), (0,)), ((), ())),
            preferred_element_type=jnp.float32,
        ))
    pad_rows = width_pad - num_tasks * head_out
    if pad_rows > 0:                    # lane-dense output: pad width to multiple of 128
        parts.append(jnp.zeros((pad_rows, latent), jnp.float32))
    w_eff = jnp.concatenate(parts, axis=0)            # (W_pad, L)

    # All tasks in one MXU matmul + one lane-dense store: (tm, L) x (L, W_pad)
    out = jax.lax.dot_general(
        rep, w_eff,
        dimension_numbers=(((1,), (1,)), ((), ())),
        preferred_element_type=jnp.float32,
    ) + hb_ref[...]
    o_ref[...] = out.astype(o_ref.dtype)


# ----------------------------------------------------------------------------
# Wrapper: pack params once, one pallas_call per forward
# ----------------------------------------------------------------------------
def pack_params(params):
    """Stack/pad per-task parameters once (weight packing, not per-call work)."""
    rot = jnp.stack(params["rotations"])               # (T, L, L)
    hw = jnp.stack(params["head_w"])                   # (T, H, L)
    hb = jnp.concatenate(params["head_b"])             # (T*H,)
    num_tasks, head_out, _ = hw.shape
    w_pad = _round_up(num_tasks * head_out, 128)
    hb_pad = jnp.zeros((1, w_pad), hb.dtype).at[0, :num_tasks * head_out].set(hb)
    return {
        "backbone_w": params["backbone_w"],            # (L, F)
        "backbone_b": params["backbone_b"].reshape(1, -1),  # (1, L)
        "rot": rot,
        "head_w": hw,
        "head_b": hb_pad,                               # (1, W_pad)
    }


def rotate_only_forward(packed, x, latent_size):
    """RotateOnly.forward (inference path): single fused Pallas call -> list of preds."""
    batch, in_f = x.shape
    wb, bb = packed["backbone_w"], packed["backbone_b"]
    rot, hw, hb = packed["rot"], packed["head_w"], packed["head_b"]
    num_tasks, head_out, lat = hw.shape
    assert rot.shape[-1] == latent_size and lat == latent_size
    w_pad = hb.shape[-1]

    tm = _batch_tile(batch)
    grid = (batch // tm,)

    kernel = functools.partial(
        _rotate_only_fused_kernel,
        num_tasks=num_tasks, head_out=head_out, width_pad=w_pad)

    out = pl.pallas_call(
        kernel,
        out_shape=jax.ShapeDtypeStruct((batch, w_pad), x.dtype),
        grid_spec=pltpu.PrefetchScalarGridSpec(
            num_scalar_prefetch=0,
            grid=grid,
            in_specs=[
                pl.BlockSpec((tm, in_f), lambda i: (i, 0)),                  # x tile
                pl.BlockSpec((lat, in_f), lambda i: (0, 0)),                 # backbone W
                pl.BlockSpec((1, lat), lambda i: (0, 0)),                    # backbone b
                pl.BlockSpec((num_tasks, lat, lat), lambda i: (0, 0, 0)),    # rotations
                pl.BlockSpec((num_tasks, head_out, lat), lambda i: (0, 0, 0)),  # head W
                pl.BlockSpec((1, w_pad), lambda i: (0, 0)),                  # head b (padded)
            ],
            out_specs=pl.BlockSpec((tm, w_pad), lambda i: (i, 0)),
        ),
        compiler_params=pltpu.CompilerParams(
            dimension_semantics=("parallel",)),
    )(x, wb, bb, rot, hw, hb)

    # Per-task predictions are static slices of the single lane-dense slab.
    return [out[:, t * head_out:(t + 1) * head_out] for t in range(num_tasks)]


# ----------------------------------------------------------------------------
# Deterministic parameter construction + pure-JAX reference
# ----------------------------------------------------------------------------
def make_params(key, in_features, latent_size, num_tasks, head_out):
    keys = jax.random.split(key, 3 + 2 * num_tasks)
    params = {
        "backbone_w": 0.1 * jax.random.normal(keys[0], (latent_size, in_features), jnp.float32),
        "backbone_b": 0.1 * jax.random.normal(keys[1], (latent_size,), jnp.float32),
        "rotations": [],
        "head_w": [],
        "head_b": [],
    }
    for i in range(num_tasks):
        # geotorch `orthogonal(..., triv='expm')` keeps rotation_i orthogonal;
        # here: deterministic orthogonal matrix from QR of a random matrix.
        m = jax.random.normal(keys[2 + i], (latent_size, latent_size), jnp.float32)
        q, _ = jnp.linalg.qr(m)
        params["rotations"].append(q.astype(jnp.float32))
        params["head_w"].append(
            0.1 * jax.random.normal(keys[2 + num_tasks + i], (head_out, latent_size), jnp.float32))
        params["head_b"].append(
            0.1 * jax.random.normal(keys[2 + num_tasks + i], (head_out,), jnp.float32))
    return params


def reference_forward(params, x, latent_size):
    rep = x @ params["backbone_w"].T + params["backbone_b"]
    preds = []
    for i in range(len(params["rotations"])):
        r = params["rotations"][i]
        z = jnp.einsum("ij,bj->bi", r, rep)
        preds.append(z @ params["head_w"][i].T + params["head_b"][i])
    return preds


if __name__ == "__main__":
    BATCH = 8
    IN_FEATURES = 16
    LATENT = 32
    NUM_TASKS = 3
    HEAD_OUT = 8

    key = jax.random.PRNGKey(0)
    k_x, k_p = jax.random.split(key)
    x = jax.random.normal(k_x, (BATCH, IN_FEATURES), jnp.float32)
    params = make_params(k_p, IN_FEATURES, LATENT, NUM_TASKS, HEAD_OUT)
    packed = pack_params(params)

    fwd = jax.jit(functools.partial(rotate_only_forward, latent_size=LATENT))
    preds = fwd(packed, x)
    preds = [jax.block_until_ready(p) for p in preds]

    refs = reference_forward(params, x, LATENT)
    for p, r in zip(preds, refs):
        assert p.shape == (BATCH, HEAD_OUT)
        assert jnp.allclose(p, r, atol=1e-4, rtol=1e-4), "mismatch vs reference"

    print("KERNEL_OK")
</pallas_src>

<mosaic_0001>
module attributes {stable_mosaic.version = 11 : i64} {
  func.func @_rotate_only_fused_kernel(%arg0: i32, %arg1: memref<8x16xf32, #tpu.memory_space<vmem>>, %arg2: memref<32x16xf32, #tpu.memory_space<vmem>>, %arg3: memref<1x32xf32, #tpu.memory_space<vmem>>, %arg4: memref<3x32x32xf32, #tpu.memory_space<vmem>>, %arg5: memref<3x8x32xf32, #tpu.memory_space<vmem>>, %arg6: memref<1x128xf32, #tpu.memory_space<vmem>>, %arg7: memref<8x128xf32, #tpu.memory_space<vmem>>) attributes {dimension_semantics = [#tpu.dimension_semantics<parallel>], iteration_bounds = array<i64: 1>, scalar_prefetch = 0 : i64, scratch_operands = 0 : i64, tpu.core_type = #tpu.core_type<tc>, window_params = [{transform_indices = @transform_0, window_bounds = array<i64: 8, 16>}, {pipeline_mode = #tpu.pipeline_mode<synchronous>, transform_indices = @transform_1, window_bounds = array<i64: 32, 16>}, {pipeline_mode = #tpu.pipeline_mode<synchronous>, transform_indices = @transform_2, window_bounds = array<i64: 1, 32>}, {pipeline_mode = #tpu.pipeline_mode<synchronous>, transform_indices = @transform_3, window_bounds = array<i64: 3, 32, 32>}, {pipeline_mode = #tpu.pipeline_mode<synchronous>, transform_indices = @transform_4, window_bounds = array<i64: 3, 8, 32>}, {pipeline_mode = #tpu.pipeline_mode<synchronous>, transform_indices = @transform_5, window_bounds = array<i64: 1, 128>}, {transform_indices = @transform_6, window_bounds = array<i64: 8, 128>}]} {
    %c0 = arith.constant 0 : index
    %c0_0 = arith.constant 0 : index
    %0 = vector.load %arg1[%c0, %c0_0] : memref<8x16xf32, #tpu.memory_space<vmem>>, vector<8x16xf32>
    %c0_1 = arith.constant 0 : index
    %c0_2 = arith.constant 0 : index
    %1 = vector.load %arg2[%c0_1, %c0_2] : memref<32x16xf32, #tpu.memory_space<vmem>>, vector<32x16xf32>
    %cst = arith.constant dense<0.000000e+00> : vector<8x32xf32>
    %2 = tpu.matmul %0, %1, %cst {dimension_numbers = #tpu.dot_dimension_numbers<[1], [1], [0], [0], [0, 0, 1, 0], [], []>} : vector<8x16xf32>, vector<32x16xf32>, vector<8x32xf32> -> vector<8x32xf32>
    %c0_3 = arith.constant 0 : index
    %c0_4 = arith.constant 0 : index
    %3 = vector.load %arg3[%c0_3, %c0_4] : memref<1x32xf32, #tpu.memory_space<vmem>>, vector<1x32xf32>
    %4 = vector.broadcast %3 : vector<1x32xf32> to vector<8x32xf32>
    %5 = arith.addf %2, %4 : vector<8x32xf32>
    %c0_5 = arith.constant 0 : index
    %c0_6 = arith.constant 0 : index
    %c0_7 = arith.constant 0 : index
    %6 = vector.load %arg5[%c0_5, %c0_6, %c0_7] : memref<3x8x32xf32, #tpu.memory_space<vmem>>, vector<1x8x32xf32>
    %7 = vector.shape_cast %6 : vector<1x8x32xf32> to vector<8x32xf32>
    %c0_8 = arith.constant 0 : index
    %c0_9 = arith.constant 0 : index
    %c0_10 = arith.constant 0 : index
    %8 = vector.load %arg4[%c0_8, %c0_9, %c0_10] : memref<3x32x32xf32, #tpu.memory_space<vmem>>, vector<1x32x32xf32>
    %9 = vector.shape_cast %8 : vector<1x32x32xf32> to vector<32x32xf32>
    %cst_11 = arith.constant dense<0.000000e+00> : vector<8x32xf32>
    %10 = tpu.matmul %7, %9, %cst_11 {dimension_numbers = #tpu.dot_dimension_numbers<[1], [0], [0], [1], [0, 0, 1, 1], [], []>} : vector<8x32xf32>, vector<32x32xf32>, vector<8x32xf32> -> vector<8x32xf32>
    %c1 = arith.constant 1 : index
    %c0_12 = arith.constant 0 : index
    %c0_13 = arith.constant 0 : index
    %11 = vector.load %arg5[%c1, %c0_12, %c0_13] : memref<3x8x32xf32, #tpu.memory_space<vmem>>, vector<1x8x32xf32>
    %12 = vector.shape_cast %11 : vector<1x8x32xf32> to vector<8x32xf32>
    %c1_14 = arith.constant 1 : index
    %c0_15 = arith.constant 0 : index
    %c0_16 = arith.constant 0 : index
    %13 = vector.load %arg4[%c1_14, %c0_15, %c0_16] : memref<3x32x32xf32, #tpu.memory_space<vmem>>, vector<1x32x32xf32>
    %14 = vector.shape_cast %13 : vector<1x32x32xf32> to vector<32x32xf32>
    %cst_17 = arith.constant dense<0.000000e+00> : vector<8x32xf32>
    %15 = tpu.matmul %12, %14, %cst_17 {dimension_numbers = #tpu.dot_dimension_numbers<[1], [0], [0], [1], [0, 0, 1, 1], [], []>} : vector<8x32xf32>, vector<32x32xf32>, vector<8x32xf32> -> vector<8x32xf32>
    %c2 = arith.constant 2 : index
    %c0_18 = arith.constant 0 : index
    %c0_19 = arith.constant 0 : index
    %16 = vector.load %arg5[%c2, %c0_18, %c0_19] : memref<3x8x32xf32, #tpu.memory_space<vmem>>, vector<1x8x32xf32>
    %17 = vector.shape_cast %16 : vector<1x8x32xf32> to vector<8x32xf32>
    %c2_20 = arith.constant 2 : index
    %c0_21 = arith.constant 0 : index
    %c0_22 = arith.constant 0 : index
    %18 = vector.load %arg4[%c2_20, %c0_21, %c0_22] : memref<3x32x32xf32, #tpu.memory_space<vmem>>, vector<1x32x32xf32>
    %19 = vector.shape_cast %18 : vector<1x32x32xf32> to vector<32x32xf32>
    %cst_23 = arith.constant dense<0.000000e+00> : vector<8x32xf32>
    %20 = tpu.matmul %17, %19, %cst_23 {dimension_numbers = #tpu.dot_dimension_numbers<[1], [0], [0], [1], [0, 0, 1, 1], [], []>} : vector<8x32xf32>, vector<32x32xf32>, vector<8x32xf32> -> vector<8x32xf32>
    %cst_24 = arith.constant 0.000000e+00 : f32
    %21 = vector.broadcast %cst_24 : f32 to vector<104x32xf32>
    %22 = tpu.concatenate %10, %15, %20, %21 in 0 : vector<8x32xf32>, vector<8x32xf32>, vector<8x32xf32>, vector<104x32xf32> -> vector<128x32xf32>
    %cst_25 = arith.constant dense<0.000000e+00> : vector<8x128xf32>
    %23 = tpu.matmul %5, %22, %cst_25 {dimension_numbers = #tpu.dot_dimension_numbers<[1], [1], [0], [0], [0, 0, 1, 0], [], []>} : vector<8x32xf32>, vector<128x32xf32>, vector<8x128xf32> -> vector<8x128xf32>
    %c0_26 = arith.constant 0 : index
    %c0_27 = arith.constant 0 : index
    %24 = vector.load %arg6[%c0_26, %c0_27] : memref<1x128xf32, #tpu.memory_space<vmem>>, vector<1x128xf32>
    %25 = vector.broadcast %24 : vector<1x128xf32> to vector<8x128xf32>
    %26 = arith.addf %23, %25 : vector<8x128xf32>
    %c0_28 = arith.constant 0 : index
    %c0_29 = arith.constant 0 : index
    %27 = vector.load %arg7[%c0_28, %c0_29] : memref<8x128xf32, #tpu.memory_space<vmem>>, vector<8x128xf32>
    tpu.vector_store %arg7[%c0_28, %c0_29], %26 {strides = array<i32>} : memref<8x128xf32, #tpu.memory_space<vmem>>, vector<8x128xf32>,
    return
  }
  func.func @transform_0(%arg0: i32) -> (i32, i32) {
    %c0_i32 = arith.constant 0 : i32
    %c0_i32_0 = arith.constant 0 : i32
    return %arg0, %c0_i32 : i32, i32
  }
  func.func @transform_1(%arg0: i32) -> (i32, i32) {
    %c0_i32 = arith.constant 0 : i32
    %c0_i32_0 = arith.constant 0 : i32
    %c0_i32_1 = arith.constant 0 : i32
    return %c0_i32, %c0_i32_0 : i32, i32
  }
  func.func @transform_2(%arg0: i32) -> (i32, i32) {
    %c0_i32 = arith.constant 0 : i32
    %c0_i32_0 = arith.constant 0 : i32
    %c0_i32_1 = arith.constant 0 : i32
    return %c0_i32, %c0_i32_0 : i32, i32
  }
  func.func @transform_3(%arg0: i32) -> (i32, i32, i32) {
    %c0_i32 = arith.constant 0 : i32
    %c0_i32_0 = arith.constant 0 : i32
    %c0_i32_1 = arith.constant 0 : i32
    %c0_i32_2 = arith.constant 0 : i32
    return %c0_i32, %c0_i32_0, %c0_i32_1 : i32, i32, i32
  }
  func.func @transform_4(%arg0: i32) -> (i32, i32, i32) {
    %c0_i32 = arith.constant 0 : i32
    %c0_i32_0 = arith.constant 0 : i32
    %c0_i32_1 = arith.constant 0 : i32
    %c0_i32_2 = arith.constant 0 : i32
    return %c0_i32, %c0_i32_0, %c0_i32_1 : i32, i32, i32
  }
  func.func @transform_5(%arg0: i32) -> (i32, i32) {
    %c0_i32 = arith.constant 0 : i32
    %c0_i32_0 = arith.constant 0 : i32
    %c0_i32_1 = arith.constant 0 : i32
    return %c0_i32, %c0_i32_0 : i32, i32
  }
  func.func @transform_6(%arg0: i32) -> (i32, i32) {
    %c0_i32 = arith.constant 0 : i32
    %c0_i32_0 = arith.constant 0 : i32
    return %arg0, %c0_i32 : i32, i32
  }
}

</mosaic_0001>

<llo_original>
// kernel: rotate_only_forward.1
$region0: #{rotate_only_forward.1}
  #allocation0 [shape = 'u32[]', space=smem, size = 0x4, offset = 0x4, fixed_abs, tag = 'smem constant byte address 0x4 - core index']
  #allocation1 [shape = 'u32[72,128]{1,0:T(1,128)}', space=vmem, size = 0x9000, scoped, tag = 'internal scratch']
  %s0 = inlined_call_operand.vmem [shape: f32[8,16], index: 0, kind: input, shape index: {}]
  %s1 = inlined_call_operand.vmem [shape: f32[32,16], index: 1, kind: input, shape index: {}]
  %s2 = inlined_call_operand.vmem [shape: f32[1,32], index: 2, kind: input, shape index: {}]
  %s3 = inlined_call_operand.hbm [shape: f32[3,32,32], index: 3, kind: input, shape index: {}]
  %s4 = inlined_call_operand.vmem [shape: f32[3,8,32], index: 4, kind: input, shape index: {}]
  %s5 = inlined_call_operand.vmem [shape: f32[1,128], index: 5, kind: input, shape index: {}]
  %s6 = inlined_call_operand.vmem [shape: f32[8,128], index: 6, kind: output, shape index: {}]
  %s7 = sld [smem:[#allocation0]]
  $region38: #{rotate_only_forward.1} parent=0
    _
  %s9 = ssub.s32 1, %s7
  %s10 = scalar_select 0, %s9, %s7
  $region1: #{rotate_only_forward.1} parent=0
    #allocation2 [shape = 'u8[49152]{0}', space=vmem, size = 0xc000, scoped, tag = 'input window, operand 3, single buffered']
    #allocation3 [shape = 's32[1]{0}', space=sflag, size = 0x4, scoped, tag = 'scoped memory for rotate_only_forward.1']
    %11 = vsyncpa [#allocation3], 0
    // Predicated region
    $region2: #{rotate_only_forward.1} parent=1 // pred_check
      _
    $region3: #{rotate_only_forward.1} parent=1 // pred_check_branch
      %13 = sbr.rel (0) target = $region5
    $region4: #{rotate_only_forward.1} parent=1 // pred_region
      _
    $region5: #{rotate_only_forward.1} parent=1 // pred_fallthru
      _
    // Predicated region
    $region6: #{rotate_only_forward.1} parent=1 // pred_check
      _
    $region7: #{rotate_only_forward.1} parent=1 // pred_check_branch
      %15 = sbr.rel (0) target = $region9
    $region8: #{rotate_only_forward.1} parent=1 // pred_region
      _
    $region9: #{rotate_only_forward.1} parent=1 // pred_fallthru
      _
    // Predicated region
    $region10: #{rotate_only_forward.1} parent=1 // pred_check
      _
    $region11: #{rotate_only_forward.1} parent=1 // pred_check_branch
      %17 = sbr.rel (0) target = $region13
    $region12: #{rotate_only_forward.1} parent=1 // pred_region
      _
    $region13: #{rotate_only_forward.1} parent=1 // pred_fallthru
      _
    // Predicated region
    $region14: #{rotate_only_forward.1} parent=1 // pred_check
      _
    $region15: #{rotate_only_forward.1} parent=1 // pred_check_branch
      %19 = sbr.rel (0) target = $region17
    $region16: #{rotate_only_forward.1} parent=1 // pred_region
      %21 = vsyncadd [#allocation3], 0
      %s22 = sshll.u32 %s3, 4
      %s23 = int_to_ptr.hbm [resolvable:$true] %s22
      %s24 = sshll.u32 [#allocation2], 4
      %s25 = int_to_ptr.vmem [resolvable:$true] %s24
      %30 = dma.hbm_to_vmem [thread:$0]  %s23, 1536, %s25, [#allocation3], 128, 128, 8
    $region17: #{rotate_only_forward.1} parent=1 // pred_fallthru
      _
    // Predicated region
    $region18: #{rotate_only_forward.1} parent=1 // pred_check
      _
    $region19: #{rotate_only_forward.1} parent=1 // pred_check_branch
      %32 = sbr.rel (0) target = $region21
    $region20: #{rotate_only_forward.1} parent=1 // pred_region
      _
    $region21: #{rotate_only_forward.1} parent=1 // pred_fallthru
      _
    // Predicated region
    $region22: #{rotate_only_forward.1} parent=1 // pred_check
      _
    $region23: #{rotate_only_forward.1} parent=1 // pred_check_branch
      %34 = sbr.rel (0) target = $region25
    $region24: #{rotate_only_forward.1} parent=1 // pred_region
      _
    $region25: #{rotate_only_forward.1} parent=1 // pred_fallthru
      _
    // Predicated region
    $region26: #{rotate_only_forward.1} parent=1 // pred_check
      _
    $region27: #{rotate_only_forward.1} parent=1 // pred_check_branch
      %36 = sbr.rel (0) target = $region29
    $region28: #{rotate_only_forward.1} parent=1 // pred_region
      %38 = dma.done [#allocation3], 1536
    $region29: #{rotate_only_forward.1} parent=1 // pred_fallthru
      _
    %v39 = vld [vmem:[%s0] sm:$0xff]
    %v40 = vld [vmem:[%s1] sm:$0xff]
    %v41 = vld [vmem:[%s1 + $0x8] sm:$0xff]
    %v42 = vld [vmem:[%s1 + $0x10] sm:$0xff]
    %v43 = vld [vmem:[%s1 + $0x18] sm:$0xff]
    %v44 = vld [vmem:[%s2] sm:$0x1]
    %v46 = vperm.slane %v44, 0
    %vm48 = vcmask 130048
    %v50 = vsel %vm48, %v39, 0
    %v53 = vsel %vm48, %v40, 0
    %v56 = vsel %vm48, %v41, 0
    %v59 = vsel %vm48, %v42, 0
    %v62 = vsel %vm48, %v43, 0
    %64 = vmatpush.xpose.msra.mxu0 0.0
    %65 = vmatpush.xpose.msra.mxu0 0.0
    %66 = vmatpush.xpose.msra.mxu0 0.0
    %67 = vmatpush.xpose.msra.mxu0 0.0
    %68 = vmatpush.xpose.msra.mxu0 0.0
    %69 = vmatpush.xpose.msra.mxu0 0.0
    %70 = vmatpush.xpose.msra.mxu0 0.0
    %71 = vmatpush.xpose.msra.mxu0 0.0
    %72 = vmatpush.xpose.msra.mxu0 0.0
    %73 = vmatpush.xpose.msra.mxu0 0.0
    %74 = vmatpush.xpose.msra.mxu0 0.0
    %75 = vmatpush.xpose.msra.mxu0 0.0
    %76 = vmatpush.xpose.msra.mxu0 %v62
    %77 = vmatpush.xpose.msra.mxu0 %v59
    %78 = vmatpush.xpose.msra.mxu0 %v56
    %79 = vmatpush.xpose.msra.mxu0 %v53
    %80 = vmatmul.f32.gmra.mxu0 %v50
    %v81 = vpop.f32.mrf.mxu0
    %v82 = vadd.f32 %v46, %v81
    %83 = vdwg.mxu0
    %v84 = vld [vmem:[%s4] sm:$0xff]
    %v85 = vld [vmem:[#allocation2] sm:$0xff]
    %v86 = vld [vmem:[#allocation2 + $0x8] sm:$0xff]
    %v87 = vld [vmem:[#allocation2 + $0x10] sm:$0xff]
    %v88 = vld [vmem:[#allocation2 + $0x18] sm:$0xff]
    %vm89 = vcmask 261120
    %v91 = vsel %vm89, %v84, 0
    %93 = vmatpush.msra.mxu0 0.0
    %94 = vmatpush.msra.mxu0 0.0
    %95 = vmatpush.msra.mxu0 0.0
    %96 = vmatpush.msra.mxu0 0.0
    %97 = vmatpush.msra.mxu0 0.0
    %98 = vmatpush.msra.mxu0 0.0
    %99 = vmatpush.msra.mxu0 0.0
    %100 = vmatpush.msra.mxu0 0.0
    %101 = vmatpush.msra.mxu0 0.0
    %102 = vmatpush.msra.mxu0 0.0
    %103 = vmatpush.msra.mxu0 0.0
    %104 = vmatpush.msra.mxu0 0.0
    %105 = vmatpush.msra.mxu0 %v88
    %106 = vmatpush.msra.mxu0 %v87
    %107 = vmatpush.msra.mxu0 %v86
    %108 = vmatpush.msra.mxu0 %v85
    %109 = vmatmul.f32.gmra.mxu0 %v91
    %v110 = vpop.f32.mrf.mxu0
    %v111 = vadd.f32 0.0, %v110
    %112 = vdwg.mxu0
    %s113 = scalar_lea.vmem %s4, 8
    %v114 = vld [vmem:[%s113] sm:$0xff]
    %s115 = scalar_lea.vmem [#allocation2], 32
    %v116 = vld [vmem:[%s115] sm:$0xff]
    %v117 = vld [vmem:[%s115 + $0x8] sm:$0xff]
    %v118 = vld [vmem:[%s115 + $0x10] sm:$0xff]
    %v119 = vld [vmem:[%s115 + $0x18] sm:$0xff]
    %v121 = vsel %vm89, %v114, 0
    %123 = vmatpush.msra.mxu0 0.0
    %124 = vmatpush.msra.mxu0 0.0
    %125 = vmatpush.msra.mxu0 0.0
    %126 = vmatpush.msra.mxu0 0.0
    %127 = vmatpush.msra.mxu0 0.0
    %128 = vmatpush.msra.mxu0 0.0
    %129 = vmatpush.msra.mxu0 0.0
    %130 = vmatpush.msra.mxu0 0.0
    %131 = vmatpush.msra.mxu0 0.0
    %132 = vmatpush.msra.mxu0 0.0
    %133 = vmatpush.msra.mxu0 0.0
    %134 = vmatpush.msra.mxu0 0.0
    %135 = vmatpush.msra.mxu0 %v119
    %136 = vmatpush.msra.mxu0 %v118
    %137 = vmatpush.msra.mxu0 %v117
    %138 = vmatpush.msra.mxu0 %v116
    %139 = vmatmul.f32.gmra.mxu0 %v121
    %v140 = vpop.f32.mrf.mxu0
    %v141 = vadd.f32 0.0, %v140
    %142 = vdwg.mxu0
    %s143 = scalar_lea.vmem %s4, 16
    %v144 = vld [vmem:[%s143] sm:$0xff]
    %s145 = scalar_lea.vmem [#allocation2], 64
    %v146 = vld [vmem:[%s145] sm:$0xff]
    %v147 = vld [vmem:[%s145 + $0x8] sm:$0xff]
    %v148 = vld [vmem:[%s145 + $0x10] sm:$0xff]
    %v149 = vld [vmem:[%s145 + $0x18] sm:$0xff]
    %v151 = vsel %vm89, %v144, 0
    %153 = vmatpush.msra.mxu0 0.0
    %154 = vmatpush.msra.mxu0 0.0
    %155 = vmatpush.msra.mxu0 0.0
    %156 = vmatpush.msra.mxu0 0.0
    %157 = vmatpush.msra.mxu0 0.0
    %158 = vmatpush.msra.mxu0 0.0
    %159 = vmatpush.msra.mxu0 0.0
    %160 = vmatpush.msra.mxu0 0.0
    %161 = vmatpush.msra.mxu0 0.0
    %162 = vmatpush.msra.mxu0 0.0
    %163 = vmatpush.msra.mxu0 0.0
    %164 = vmatpush.msra.mxu0 0.0
    %165 = vmatpush.msra.mxu0 %v149
    %166 = vmatpush.msra.mxu0 %v148
    %167 = vmatpush.msra.mxu0 %v147
    %168 = vmatpush.msra.mxu0 %v146
    %169 = vmatmul.f32.gmra.mxu0 %v151
    %v170 = vpop.f32.mrf.mxu0
    %v171 = vadd.f32 0.0, %v170
    %172 = vdwg.mxu0
    %v173 = vld [vmem:[%s5] sm:$0x1]
    %v175 = vperm.slane %v173, 0
    %v178 = vsel %vm89, %v82, 0
    %v181 = vsel %vm89, %v111, 0
    %v184 = vsel %vm89, %v141, 0
    %v187 = vsel %vm89, %v171, 0
    %v190 = vsel %vm89, 0.0, 0
    %192 = vmatpush.xpose.msra.mxu0 %v190
    %193 = vmatpush.xpose.msra.mxu0 %v190
    %194 = vmatpush.xpose.msra.mxu0 %v190
    %195 = vmatpush.xpose.msra.mxu0 %v190
    %196 = vmatpush.xpose.msra.mxu0 %v190
    %197 = vmatpush.xpose.msra.mxu0 %v190
    %198 = vmatpush.xpose.msra.mxu0 %v190
    %199 = vmatpush.xpose.msra.mxu0 %v190
    %200 = vmatpush.xpose.msra.mxu0 %v190
    %201 = vmatpush.xpose.msra.mxu0 %v190
    %202 = vmatpush.xpose.msra.mxu0 %v190
    %203 = vmatpush.xpose.msra.mxu0 %v190
    %204 = vmatpush.xpose.msra.mxu0 %v190
    %205 = vmatpush.xpose.msra.mxu0 %v187
    %206 = vmatpush.xpose.msra.mxu0 %v184
    %207 = vmatpush.xpose.msra.mxu0 %v181
    %208 = vmatmul.f32.gmra.mxu0 %v178
    %v209 = vpop.f32.mrf.mxu0
    %v210 = vadd.f32 %v175, %v209
    %211 = vdwg.mxu0
    %212 = vst [vmem:[%s6] sm:$0xff] %v210
    // Predicated region
    $region30: #{rotate_only_forward.1} parent=1 // pred_check
      _
    $region31: #{rotate_only_forward.1} parent=1 // pred_check_branch
      %214 = sbr.rel (0) target = $region33
    $region32: #{rotate_only_forward.1} parent=1 // pred_region
      _
    $region33: #{rotate_only_forward.1} parent=1 // pred_fallthru
      _
    // Predicated region
    $region34: #{rotate_only_forward.1} parent=1 // pred_check
      _
    $region35: #{rotate_only_forward.1} parent=1 // pred_check_branch
      %216 = sbr.rel (0) target = $region37
    $region36: #{rotate_only_forward.1} parent=1 // pred_region
      _
    $region37: #{rotate_only_forward.1} parent=1 // pred_fallthru
      _
    %217 = vsyncpa [#allocation3], 1

</llo_original>
